<compile_context>
chip_gen: v5e
topology: v5e:2x2
jax: 0.10.0
libtpu: 0.0.40
codegen_flags: <defaults>
</compile_context>

<pallas_src>
import functools

import jax
import jax.numpy as jnp
from jax import lax
from jax.experimental import pallas as pl
from jax.experimental.pallas import tpu as pltpu


# ----------------------------------------------------------------------------
# Kernel 1: sigmoid + 3x3 local-maximum suppression ("peak NMS")
# ----------------------------------------------------------------------------
def _heatmap_peak_kernel(x_ref, o_ref, *, use_lane_roll):
    hm = jax.nn.sigmoid(x_ref[...].astype(jnp.float32))       # (tC, H, W) f32
    tC, H, W = hm.shape
    # -1.0 plays the role of F.max_pool2d's -inf padding: sigmoid outputs are
    # >= 0, so the padding can never win the window max.  (Only valid because
    # this kernel sees post-sigmoid values, never raw logits.)
    neg = jnp.float32(-1.0)

    if use_lane_roll:
        # Lane-axis (W) neighbours via the XLU rotate (no lane-misaligned
        # slice+concat temporaries); mask the wrapped column afterwards.
        lane = lax.broadcasted_iota(jnp.int32, hm.shape, 2)
        left = jnp.where(lane == 0, neg, pltpu.roll(hm, 1, 2))          # hm[..., i-1]
        right = jnp.where(lane == W - 1, neg, pltpu.roll(hm, W - 1, 2))  # hm[..., i+1]
    else:
        # Fallback when the lane dim is not 128-aligned.
        neg_col = jnp.full((tC, H, 1), neg, jnp.float32)
        left = jnp.concatenate([neg_col, hm[:, :, : W - 1]], axis=2)
        right = jnp.concatenate([hm[:, :, 1:], neg_col], axis=2)
    row_max = jnp.maximum(jnp.maximum(left, hm), right)        # 1x3 max (lanes)

    # TODO(synk): sublane-axis (H) shifts kept as slice+concat for lowering
    # portability; pltpu.roll(axis=1) would move these onto the XLU as well.
    neg_row = jnp.full((tC, 1, W), neg, jnp.float32)
    up = jnp.concatenate([neg_row, row_max[:, : H - 1, :]], axis=1)
    down = jnp.concatenate([row_max[:, 1:, :], neg_row], axis=1)
    win_max = jnp.maximum(jnp.maximum(up, row_max), down)      # 3x3 max

    # keep = (max_pool == heatmap); out = heatmap * keep.  Compare is done in
    # f32; the (possibly narrower) cast happens only at the store.
    o_ref[...] = jnp.where(win_max == hm, hm, jnp.float32(0.0)).astype(o_ref.dtype)


def heatmap_peak_nms(heatmap, *, block_bytes=4 * 1024 * 1024,
                     vmem_limit_bytes=48 * 1024 * 1024):
    """sigmoid + 3x3 peak suppression, tiled over (batch, class-chunks).

    Blocks target ~4 MB of f32 per grid step (amortizes the ~0.35 us per-step
    overhead while the in/out double-buffers + in-kernel temporaries stay
    inside v7x's 64 MiB VMEM with the explicit 48 MiB scoped limit), and the
    grid is kept at >= 4 steps so megacore sharding has work for both cores.
    """
    B, C, H, W = heatmap.shape
    plane_bytes = H * W * 4                       # budget in f32 (compute dtype)
    class_block = max(1, min(C, block_bytes // plane_bytes))
    min_steps = min(4, B * C)
    while class_block > 1 and B * pl.cdiv(C, class_block) < min_steps:
        class_block = (class_block + 1) // 2
    tC = class_block
    grid = (B, pl.cdiv(C, tC))

    use_lane_roll = (W % 128 == 0) and (H % 8 == 0)
    kern = functools.partial(_heatmap_peak_kernel, use_lane_roll=use_lane_roll)
    return pl.pallas_call(
        kern,
        # dtype-preserving writeback: a bf16 head halves the output stream and
        # the downstream top_k read; f32 heads stay f32.
        out_shape=jax.ShapeDtypeStruct((B, C, H, W), heatmap.dtype),
        grid=grid,
        in_specs=[pl.BlockSpec((None, tC, H, W), lambda b, c: (b, c, 0, 0))],
        out_specs=pl.BlockSpec((None, tC, H, W), lambda b, c: (b, c, 0, 0)),
        compiler_params=pltpu.CompilerParams(
            dimension_semantics=("parallel", "parallel"),
            vmem_limit_bytes=vmem_limit_bytes),
    )(heatmap)


# ----------------------------------------------------------------------------
# Kernel 2: box assembly + clamp + score-threshold fill (fixed-size outputs)
# inputs : 8 per-field arrays, each (B, Mp) f32
#          [score, class, xs, ys, off_x, off_y, w, h]
# output : (6, B, Mp) f32 rows = [score, class, x1, y1, x2, y2], Mp % 128 == 0
# ----------------------------------------------------------------------------
def _decode_fill_kernel(score_ref, cls_ref, xs_ref, ys_ref, ox_ref, oy_ref,
                        w_ref, h_ref, o_ref, *, image_w, image_h, stride,
                        score_thresh):
    score = score_ref[...]                                     # (B, Mp)
    cls = cls_ref[...]
    cx = xs_ref[...] + ox_ref[...]                             # xs + offset_x
    cy = ys_ref[...] + oy_ref[...]                             # ys + offset_y
    hw = 0.5 * w_ref[...]
    hh = 0.5 * h_ref[...]
    s = jnp.float32(stride)
    x1 = jnp.maximum((cx - hw) * s, 0.0)
    y1 = jnp.maximum((cy - hh) * s, 0.0)
    x2 = jnp.minimum((cx + hw) * s, jnp.float32(image_w - 1))
    y2 = jnp.minimum((cy + hh) * s, jnp.float32(image_h - 1))
    valid = score > jnp.float32(score_thresh)
    neg1 = jnp.float32(-1.0)
    # Field axis leading -> stack concatenates over a non-minor dim (cheap),
    # and the result is written with a single lane-dense whole-block store.
    out = jnp.stack([jnp.where(valid, score, neg1),
                     jnp.where(valid, cls, neg1),
                     jnp.where(valid, x1, neg1),
                     jnp.where(valid, y1, neg1),
                     jnp.where(valid, x2, neg1),
                     jnp.where(valid, y2, neg1)], axis=0)      # (6, B, Mp)
    o_ref[...] = out


def decode_fill(fields, image_w, image_h, stride, score_thresh):
    B, Mp = fields[0].shape
    kern = functools.partial(_decode_fill_kernel, image_w=image_w,
                             image_h=image_h, stride=stride,
                             score_thresh=score_thresh)
    return pl.pallas_call(
        kern,
        out_shape=jax.ShapeDtypeStruct((6, B, Mp), jnp.float32),
        in_specs=[pl.BlockSpec(memory_space=pltpu.MemorySpace.VMEM)] * 8,
        out_specs=pl.BlockSpec(memory_space=pltpu.MemorySpace.VMEM),
    )(*fields)


# ----------------------------------------------------------------------------
# Decoder: Pallas kernels + plain-JAX top-k / gather glue
# ----------------------------------------------------------------------------
class CenterNetDecoderPallas:
    def __init__(self, image_w, image_h, min_score_threshold=0.05,
                 max_detection_num=100, topk=100, stride=4):
        self.image_w = image_w
        self.image_h = image_h
        self.min_score_threshold = min_score_threshold
        self.max_detection_num = max_detection_num
        self.topk = topk
        self.stride = stride

    def __call__(self, heatmap_heads, offset_heads, wh_heads):
        B, C, H, W = heatmap_heads.shape
        K = self.topk
        M = self.max_detection_num
        Mp = ((M + 127) // 128) * 128            # lane-dense output width

        # Pallas kernel 1: sigmoid + 3x3 peak NMS
        hm = heatmap_peak_nms(heatmap_heads)                   # (B, C, H, W)
        hm_flat = hm.reshape(B, C, H * W)

        # per-class top-k (data-dependent -> plain JAX)
        cls_scores, cls_idx = lax.top_k(hm_flat, K)            # (B, C, K)
        ys = jnp.floor_divide(cls_idx, W).astype(jnp.float32)
        xs = jnp.remainder(cls_idx, W).astype(jnp.float32)

        # global top-k across classes
        topk_score, sel = lax.top_k(cls_scores.reshape(B, C * K), K)   # (B, K)
        topk_score = topk_score.astype(jnp.float32)
        topk_classes = jnp.floor_divide(sel, K).astype(jnp.float32)
        spatial_idx = jnp.take_along_axis(cls_idx.reshape(B, C * K), sel, axis=1)
        topk_ys = jnp.take_along_axis(ys.reshape(B, C * K), sel, axis=1)
        topk_xs = jnp.take_along_axis(xs.reshape(B, C * K), sel, axis=1)

        # Gather offset / wh at the selected spatial locations directly in the
        # NCHW layout (no full-tensor NCHW->NHWC transpose round trips).
        off_flat = offset_heads.reshape(B, 2, H * W)
        wh_flat = wh_heads.reshape(B, 2, H * W)
        idx = jnp.broadcast_to(spatial_idx[:, None, :], (B, 2, K))
        off = jnp.take_along_axis(off_flat, idx, axis=2).astype(jnp.float32)
        wh = jnp.take_along_axis(wh_flat, idx, axis=2).astype(jnp.float32)

        # pad / truncate each field to the lane-padded detection count.  Scores
        # are sorted desc, so the ">threshold" survivors are a prefix and
        # per-slot masking reproduces the torch prefix-fill exactly.
        def fit(x, fill):
            x = x.astype(jnp.float32)
            if K >= Mp:
                return x[:, :Mp]
            pad = jnp.full((B, Mp - K), fill, jnp.float32)
            return jnp.concatenate([x, pad], axis=1)

        fields = (fit(topk_score, -1.0), fit(topk_classes, -1.0),
                  fit(topk_xs, 0.0), fit(topk_ys, 0.0),
                  fit(off[:, 0, :], 0.0), fit(off[:, 1, :], 0.0),
                  fit(wh[:, 0, :], 0.0), fit(wh[:, 1, :], 0.0))

        # Pallas kernel 2: box assembly + clamp + threshold fill
        out = decode_fill(fields, self.image_w, self.image_h, self.stride,
                          self.min_score_threshold)            # (6, B, Mp)
        batch_scores = out[0, :, :M]                           # (B, M)
        batch_classes = out[1, :, :M]                          # (B, M)
        batch_pred_bboxes = jnp.transpose(out[2:6, :, :M], (1, 2, 0))  # (B, M, 4)
        return batch_scores, batch_classes, batch_pred_bboxes


if __name__ == "__main__":
    key = jax.random.PRNGKey(0)
    # W is a multiple of 128 (and H of 8) so kernel 1 exercises the roll path.
    B, C, H, W = 2, 8, 16, 128
    stride = 4
    image_w, image_h = W * stride, H * stride
    max_det, topk = 16, 20

    k1, k2, k3 = jax.random.split(key, 3)
    heatmap_heads = jax.random.normal(k1, (B, C, H, W), jnp.float32)
    offset_heads = jax.random.uniform(k2, (B, 2, H, W), jnp.float32)
    wh_heads = jax.random.uniform(k3, (B, 2, H, W), jnp.float32, 2.0, 12.0)

    decoder = CenterNetDecoderPallas(image_w, image_h,
                                     min_score_threshold=0.05,
                                     max_detection_num=max_det,
                                     topk=topk, stride=stride)
    scores, classes, boxes = decoder(heatmap_heads, offset_heads, wh_heads)
    jax.block_until_ready((scores, classes, boxes))

    assert scores.shape == (B, max_det)
    assert classes.shape == (B, max_det)
    assert boxes.shape == (B, max_det, 4)
    # scores are sigmoid outputs or the -1 fill; also catches NaN propagation
    assert bool(jnp.all((scores >= -1.0) & (scores <= 1.0)))
    assert bool(jnp.all(boxes >= -1.0))
    print("KERNEL_OK")
</pallas_src>

<mosaic_0001>
module attributes {stable_mosaic.version = 11 : i64} {
  func.func @_heatmap_peak_kernel(%arg0: i32, %arg1: i32, %arg2: memref<1x4x16x128xf32, #tpu.memory_space<vmem>>, %arg3: memref<1x4x16x128xf32, #tpu.memory_space<vmem>>) attributes {dimension_semantics = [#tpu.dimension_semantics<parallel>, #tpu.dimension_semantics<parallel>], iteration_bounds = array<i64: 2, 2>, scalar_prefetch = 0 : i64, scratch_operands = 0 : i64, tpu.core_type = #tpu.core_type<tc>, window_params = [{transform_indices = @transform_0, window_bounds = array<i64: 1, 4, 16, 128>}, {transform_indices = @transform_1, window_bounds = array<i64: 1, 4, 16, 128>}]} {
    %c0 = arith.constant 0 : index
    %c0_0 = arith.constant 0 : index
    %c0_1 = arith.constant 0 : index
    %c0_2 = arith.constant 0 : index
    %0 = vector.load %arg2[%c0, %c0_0, %c0_1, %c0_2] : memref<1x4x16x128xf32, #tpu.memory_space<vmem>>, vector<1x4x16x128xf32>
    %1 = vector.shape_cast %0 : vector<1x4x16x128xf32> to vector<4x16x128xf32>
    %2 = arith.negf %1 : vector<4x16x128xf32>
    %3 = math.exp %2 : vector<4x16x128xf32>
    %cst = arith.constant 1.000000e+00 : f32
    %4 = vector.broadcast %cst : f32 to vector<4x16x128xf32>
    %5 = arith.addf %4, %3 : vector<4x16x128xf32>
    %6 = arith.divf %4, %5 : vector<4x16x128xf32>
    %7 = tpu.iota {dimensions = array<i32: 2>} : vector<4x16x128xi32>
    %c0_i32 = arith.constant 0 : i32
    %8 = vector.broadcast %c0_i32 : i32 to vector<4x16x128xi32>
    %9 = arith.cmpi eq, %7, %8 : vector<4x16x128xi32>
    %c1_i32 = arith.constant 1 : i32
    %10 = tpu.dynamic_rotate %6 by %c1_i32 dim 2 : vector<4x16x128xf32>, i32 -> vector<4x16x128xf32>
    %cst_3 = arith.constant -1.000000e+00 : f32
    %11 = vector.broadcast %cst_3 : f32 to vector<4x16x128xf32>
    %12 = arith.select %9, %11, %10 : vector<4x16x128xi1>, vector<4x16x128xf32>
    %c127_i32 = arith.constant 127 : i32
    %13 = vector.broadcast %c127_i32 : i32 to vector<4x16x128xi32>
    %14 = arith.cmpi eq, %7, %13 : vector<4x16x128xi32>
    %c127_i32_4 = arith.constant 127 : i32
    %15 = tpu.dynamic_rotate %6 by %c127_i32_4 dim 2 : vector<4x16x128xf32>, i32 -> vector<4x16x128xf32>
    %cst_5 = arith.constant -1.000000e+00 : f32
    %16 = vector.broadcast %cst_5 : f32 to vector<4x16x128xf32>
    %17 = arith.select %14, %16, %15 : vector<4x16x128xi1>, vector<4x16x128xf32>
    %18 = arith.maximumf %12, %6 : vector<4x16x128xf32>
    %19 = arith.maximumf %18, %17 : vector<4x16x128xf32>
    %cst_6 = arith.constant -1.000000e+00 : f32
    %20 = vector.broadcast %cst_6 : f32 to vector<4x1x128xf32>
    %21 = vector.extract_strided_slice %19 {offsets = [0, 0, 0], sizes = [4, 15, 128], strides = [1, 1, 1]} : vector<4x16x128xf32> to vector<4x15x128xf32>
    %22 = tpu.concatenate %20, %21 in 1 : vector<4x1x128xf32>, vector<4x15x128xf32> -> vector<4x16x128xf32>
    %23 = vector.extract_strided_slice %19 {offsets = [0, 1, 0], sizes = [4, 15, 128], strides = [1, 1, 1]} : vector<4x16x128xf32> to vector<4x15x128xf32>
    %24 = tpu.concatenate %23, %20 in 1 : vector<4x15x128xf32>, vector<4x1x128xf32> -> vector<4x16x128xf32>
    %25 = arith.maximumf %22, %19 : vector<4x16x128xf32>
    %26 = arith.maximumf %25, %24 : vector<4x16x128xf32>
    %27 = arith.cmpf oeq, %26, %6 : vector<4x16x128xf32>
    %cst_7 = arith.constant 0.000000e+00 : f32
    %28 = vector.broadcast %cst_7 : f32 to vector<4x16x128xf32>
    %29 = arith.select %27, %6, %28 : vector<4x16x128xi1>, vector<4x16x128xf32>
    %c0_8 = arith.constant 0 : index
    %c0_9 = arith.constant 0 : index
    %c0_10 = arith.constant 0 : index
    %c0_11 = arith.constant 0 : index
    %30 = vector.load %arg3[%c0_8, %c0_9, %c0_10, %c0_11] : memref<1x4x16x128xf32, #tpu.memory_space<vmem>>, vector<1x4x16x128xf32>
    %31 = vector.shape_cast %30 : vector<1x4x16x128xf32> to vector<4x16x128xf32>
    %32 = vector.shape_cast %29 : vector<4x16x128xf32> to vector<1x4x16x128xf32>
    tpu.vector_store %arg3[%c0_8, %c0_9, %c0_10, %c0_11], %32 {strides = array<i32>} : memref<1x4x16x128xf32, #tpu.memory_space<vmem>>, vector<1x4x16x128xf32>,
    return
  }
  func.func @transform_0(%arg0: i32, %arg1: i32) -> (i32, i32, i32, i32) {
    %c0_i32 = arith.constant 0 : i32
    %c0_i32_0 = arith.constant 0 : i32
    %c0_i32_1 = arith.constant 0 : i32
    return %arg0, %arg1, %c0_i32, %c0_i32_0 : i32, i32, i32, i32
  }
  func.func @transform_1(%arg0: i32, %arg1: i32) -> (i32, i32, i32, i32) {
    %c0_i32 = arith.constant 0 : i32
    %c0_i32_0 = arith.constant 0 : i32
    %c0_i32_1 = arith.constant 0 : i32
    return %arg0, %arg1, %c0_i32, %c0_i32_0 : i32, i32, i32, i32
  }
}

</mosaic_0001>

<llo_original>
// kernel: tpu_custom_call.1
$region0: #{tpu_custom_call.1}
  #allocation0 [shape = 'u32[]', space=smem, size = 0x4, offset = 0x4, fixed_abs, tag = 'smem constant byte address 0x4 - core index']
  #allocation1 [shape = 'u32[72,128]{1,0:T(1,128)}', space=vmem, size = 0x9000, scoped, tag = 'internal scratch']
  %s0 = inlined_call_operand.hbm [shape: f32[2,8,16,128], index: 0, kind: input, shape index: {}]
  %s1 = inlined_call_operand.hbm [shape: f32[2,8,16,128], index: 1, kind: output, shape index: {}]
  %s2 = sld [smem:[#allocation0]]
  $region41: #{tpu_custom_call.1} parent=0
    _
  %s4 = ssub.s32 1, %s2
  %s5 = scalar_select 0, %s4, %s2
  $region1: #{tpu_custom_call.1} parent=0
    #allocation2 [shape = 'u8[65536]{0}', space=vmem, size = 0x10000, scoped, tag = 'input window, operand 0']
    #allocation3 [shape = 's32[2]{0}', space=sflag, size = 0x8, scoped, tag = 'scoped memory for tpu_custom_call.1']
    #allocation4 [shape = 's32[2]{0}', space=sflag, size = 0x8, scoped, tag = 'scoped memory for tpu_custom_call.1']
    #allocation5 [shape = 'u8[65536]{0}', space=vmem, size = 0x10000, scoped, tag = 'output window, operand 0']
    %6 = vsyncpa [#allocation3], 0
    %s7 = scalar_lea.sflag [#allocation3], 1
    %8 = vsyncpa %s7, 0
    %9 = vsyncpa [#allocation4], 0
    %s10 = scalar_lea.sflag [#allocation4], 1
    %11 = vsyncpa %s10, 0
    loop: start=0, step=1, limit=6
    $region2: #{tpu_custom_call.1} parent=1 // loop_pre_header
      _
    $region3: #{tpu_custom_call.1} parent=1 // loop_header
      %s13 = sphi 0, %s17
      %p14 = scmp.ge.s32.totalorder %s13, 6
      %s20 = sphi 0, %s32
      %s21 = sphi 0, %s28
      %s22 = sphi 0, %s20
      %s23 = sphi 0, %s21
      %s24 = sphi 0, %s22
      %s25 = sphi 0, %s23
      %s37 = sphi 0, %s39
      %s40 = sphi 0, %s37
      %s41 = sphi 0, %s40
      %s57 = sphi 0, %s41
      %s65 = sphi 0, %s67
      %s68 = sphi 0, %s65
      %s69 = sphi 0, %s68
      %s85 = sphi 0, %s69
    $region4: #{tpu_custom_call.1} parent=1 // loop_header_branch
      %16 = sbr.rel (%p14) target = $region8
    $region5: #{tpu_custom_call.1} parent=1 // loop_body
      %s18 = ssub.s32 %s13, 1
      %s19 = ssub.s32 %s13, 2
      %s26 = sadd.s32 1, %s21
      %p27 = scmp.ge.s32.totalorder %s26, 2
      %s28 = scalar_select %p27, 0, %s26
      %s29 = sadd.s32 1, %s20
      %s30 = scalar_select %p27, %s29, %s20
      %p31 = scmp.ge.s32.totalorder %s30, 2
      %s32 = scalar_select %p31, 0, %s30
      %s33 = ssub.s32 %s20, %s32
      %s34 = ssub.s32 %s21, %s28
      %s35 = sor.u32 %s33, %s34
      %p36 = scmp.eq.s32.totalorder %s35, 0
      %s38 = sadd.s32 %s37, 1
      %s39 = scalar_select %p36, %s37, %s38
      %p42 = pneg %p36
      %p43 = scmp.eq.s32.totalorder %s13, 3
      %p44 = por %p42, %p43
      %p45 = scmp.ne.s32.totalorder %s37, %s40
      %p46 = scmp.eq.s32.totalorder %s13, 0
      %p47 = por %p45, %p46
      %p48 = scmp.ne.s32.totalorder %s37, %s40
      %p49 = scmp.eq.s32.totalorder %s18, 3
      %p50 = por %p48, %p49
      %p51 = scmp.ne.s32.totalorder %s40, %s41
      %p52 = scmp.eq.s32.totalorder %s18, 0
      %p53 = por %p51, %p52
      %p54 = scmp.ne.s32.totalorder %s40, %s41
      %p55 = scmp.eq.s32.totalorder %s19, 3
      %p56 = por %p54, %p55
      %p58 = scmp.ne.s32.totalorder %s41, %s57
      %p59 = scmp.eq.s32.totalorder %s19, 0
      %p60 = por %p58, %p59
      %s61 = ssub.s32 %s20, %s32
      %s62 = ssub.s32 %s21, %s28
      %s63 = sor.u32 %s61, %s62
      %p64 = scmp.eq.s32.totalorder %s63, 0
      %s66 = sadd.s32 %s65, 1
      %s67 = scalar_select %p64, %s65, %s66
      %p70 = pneg %p64
      %p71 = scmp.eq.s32.totalorder %s13, 3
      %p72 = por %p70, %p71
      %p73 = scmp.ne.s32.totalorder %s65, %s68
      %p74 = scmp.eq.s32.totalorder %s13, 0
      %p75 = por %p73, %p74
      %p76 = scmp.ne.s32.totalorder %s65, %s68
      %p77 = scmp.eq.s32.totalorder %s18, 3
      %p78 = por %p76, %p77
      %p79 = scmp.ne.s32.totalorder %s68, %s69
      %p80 = scmp.eq.s32.totalorder %s18, 0
      %p81 = por %p79, %p80
      %p82 = scmp.ne.s32.totalorder %s68, %s69
      %p83 = scmp.eq.s32.totalorder %s19, 3
      %p84 = por %p82, %p83
      %p86 = scmp.ne.s32.totalorder %s69, %s85
      %p87 = scmp.eq.s32.totalorder %s19, 0
      %p88 = por %p86, %p87
      %p89 = scmp.le.s32.totalorder 1, %s13
      %p90 = scmp.lt.s32.totalorder %s13, 5
      %p91 = pnand %p89, %p90
      %p92 = pneg %p91
      // Predicated region
      $region9: #{tpu_custom_call.1} parent=5 // pred_check
        _
      $region10: #{tpu_custom_call.1} parent=5 // pred_check_branch
        %94 = sbr.rel (%p91) target = $region12
      $region11: #{tpu_custom_call.1} parent=5 // pred_region
        %s95 = ssub.s32 %s13, 1
      $region12: #{tpu_custom_call.1} parent=5 // pred_fallthru
        _
      %p96 = scmp.lt.s32.totalorder %s13, 4
      // Predicated region
      $region13: #{tpu_custom_call.1} parent=5 // pred_check
        %p97 = pneg %p96
      $region14: #{tpu_custom_call.1} parent=5 // pred_check_branch
        %99 = sbr.rel (%p97) target = $region16
      $region15: #{tpu_custom_call.1} parent=5 // pred_region
        // Predicated region
        $region17: #{tpu_custom_call.1} parent=15 // pred_check
          %p100 = pneg %p47
        $region18: #{tpu_custom_call.1} parent=15 // pred_check_branch
          %102 = sbr.rel (%p100) target = $region20
        $region19: #{tpu_custom_call.1} parent=15 // pred_region
          %s103 = sand.u32 %s37, 1
          %s104 = scalar_lea.sflag [#allocation3], %s103
          %s105 = sand.u32 %s37, 1
          %s106 = smul.addr %s105, 64
          %s107 = scalar_lea.vmem [#allocation2], %s106
          %s108 = smul.u32 4, %s21
          %110 = vsyncadd %s104, 0
          %s111 = smul.addr %s108, 2
          %s112 = smul.addr %s20, 16
          %s113 = sadd.s32 %s111, %s112
          %s114 = smul.addr %s113, 8
          %s115 = scalar_lea.hbm %s0, %s114
          %s116 = sshll.u32 %s115, 4
          %s117 = int_to_ptr.hbm [resolvable:$true] %s116
          %s118 = sshll.u32 %s107, 4
          %s119 = int_to_ptr.vmem [resolvable:$true] %s118
          %124 = dma.hbm_to_vmem [thread:$0]  %s117, 1024, %s119, %s104, 128, 128, 8
        $region20: #{tpu_custom_call.1} parent=15 // pred_fallthru
          _
      $region16: #{tpu_custom_call.1} parent=5 // pred_fallthru
        _
      %p125 = scmp.le.s32.totalorder 1, %s13
      %p126 = scmp.lt.s32.totalorder %s13, 5
      %p127 = pnand %p125, %p126
      %p128 = pneg %p127
      // Predicated region
      $region21: #{tpu_custom_call.1} parent=5 // pred_check
        _
      $region22: #{tpu_custom_call.1} parent=5 // pred_check_branch
        %130 = sbr.rel (%p127) target = $region24
      $region23: #{tpu_custom_call.1} parent=5 // pred_region
        %s131 = ssub.s32 %s13, 1
        %s132 = sand.u32 %s40, 1
        %s133 = scalar_lea.sflag [#allocation3], %s132
        %s134 = sand.u32 %s40, 1
        %s135 = smul.addr %s134, 64
        %s136 = scalar_lea.vmem [#allocation2], %s135
        // Predicated region
        $region25: #{tpu_custom_call.1} parent=23 // pred_check
          %p137 = pneg %p53
        $region26: #{tpu_custom_call.1} parent=23 // pred_check_branch
          %139 = sbr.rel (%p137) target = $region28
        $region27: #{tpu_custom_call.1} parent=23 // pred_region
          %141 = dma.done %s133, 1024
        $region28: #{tpu_custom_call.1} parent=23 // pred_fallthru
          _
        %s142 = sand.u32 %s40, 1
        %s143 = scalar_lea.sflag [#allocation3], %s142
        %s144 = sand.u32 %s40, 1
        %s145 = smul.addr %s144, 64
        %s146 = scalar_lea.vmem [#allocation2], %s145
        %p147 = pneg %p53
        %p148 = pneg %p50
        %p149 = pneg %p81
        %p150 = pneg %p78
        %s151 = sand.u32 %s68, 1
        %s152 = scalar_lea.sflag [#allocation4], %s151
        %s153 = sand.u32 %s68, 1
        %s154 = smul.addr %s153, 64
        %s155 = scalar_lea.vmem [#allocation5], %s154
        %s156 = smul.u32 4, %s23
        %s157 = smul.u32 4, %s23
        %v158 = vld [vmem:[%s136] sm:$0xff]
        %v159 = vld [vmem:[%s136 + $0x8] sm:$0xff]
        %v160 = vld [vmem:[%s136 + $0x10] sm:$0xff]
        %v161 = vld [vmem:[%s136 + $0x18] sm:$0xff]
        %v162 = vld [vmem:[%s136 + $0x20] sm:$0xff]
        %v163 = vld [vmem:[%s136 + $0x28] sm:$0xff]
        %v164 = vld [vmem:[%s136 + $0x30] sm:$0xff]
        %v165 = vld [vmem:[%s136 + $0x38] sm:$0xff]
        %v166 = vxor.u32 %v158, 2147483648
        %v167 = vxor.u32 %v159, 2147483648
        %v168 = vxor.u32 %v160, 2147483648
        %v169 = vxor.u32 %v161, 2147483648
        %v170 = vxor.u32 %v162, 2147483648
        %v171 = vxor.u32 %v163, 2147483648
        %v172 = vxor.u32 %v164, 2147483648
        %v173 = vxor.u32 %v165, 2147483648
        %v174 = vmul.f32 %v166, 1.442695
        %v175 = vpow.pop %v174
        %v176 = vmul.f32 %v167, 1.442695
        %v177 = vpow.pop %v176
        %v178 = vmul.f32 %v168, 1.442695
        %v179 = vpow.pop %v178
        %v180 = vmul.f32 %v169, 1.442695
        %v181 = vpow.pop %v180
        %v182 = vmul.f32 %v170, 1.442695
        %v183 = vpow.pop %v182
        %v184 = vmul.f32 %v171, 1.442695
        %v185 = vpow.pop %v184
        %v186 = vmul.f32 %v172, 1.442695
        %v187 = vpow.pop %v186
        %v188 = vmul.f32 %v173, 1.442695
        %v189 = vpow.pop %v188
        %v190 = vadd.f32 %v175, 1.0
        %v191 = vadd.f32 %v177, 1.0
        %v192 = vadd.f32 %v179, 1.0
        %v193 = vadd.f32 %v181, 1.0
        %v194 = vadd.f32 %v183, 1.0
        %v195 = vadd.f32 %v185, 1.0
        %v196 = vadd.f32 %v187, 1.0
        %v197 = vadd.f32 %v189, 1.0
        %v198 = vrcp.pop %v190
        %v199 = vmul.f32 %v190, %v198
        %v200 = vsub.f32 1.0, %v199
        %v201 = vmul.f32 %v198, %v200
        %v202 = vadd.f32 %v198, %v201
        %vm203 = vweird.f32 %v190
        %vm204 = vweird.f32 %v198
        %vm205 = vmor %vm203, %vm204
        %v206 = vsel %vm205, %v198, %v202
        %v207 = vand.u32 2147483647, %v190
        %vm208 = vcmp.eq.f32.partialorder %v207, 8.507059e+37
        %v209 = vand.u32 %v190, 2147483648
        %v210 = vor.u32 1.1754944e-38, %v209
        %v211 = vsel %vm208, %v210, %v206
        %v212 = vmul.f32 1.0, %v211
        %v213 = vrcp.pop %v191
        %v214 = vmul.f32 %v191, %v213
        %v215 = vsub.f32 1.0, %v214
        %v216 = vmul.f32 %v213, %v215
        %v217 = vadd.f32 %v213, %v216
        %vm218 = vweird.f32 %v191
        %vm219 = vweird.f32 %v213
        %vm220 = vmor %vm218, %vm219
        %v221 = vsel %vm220, %v213, %v217
        %v222 = vand.u32 2147483647, %v191
        %vm223 = vcmp.eq.f32.partialorder %v222, 8.507059e+37
        %v224 = vand.u32 %v191, 2147483648
        %v225 = vor.u32 1.1754944e-38, %v224
        %v226 = vsel %vm223, %v225, %v221
        %v227 = vmul.f32 1.0, %v226
        %v228 = vrcp.pop %v192
        %v229 = vmul.f32 %v192, %v228
        %v230 = vsub.f32 1.0, %v229
        %v231 = vmul.f32 %v228, %v230
        %v232 = vadd.f32 %v228, %v231
        %vm233 = vweird.f32 %v192
        %vm234 = vweird.f32 %v228
        %vm235 = vmor %vm233, %vm234
        %v236 = vsel %vm235, %v228, %v232
        %v237 = vand.u32 2147483647, %v192
        %vm238 = vcmp.eq.f32.partialorder %v237, 8.507059e+37
        %v239 = vand.u32 %v192, 2147483648
        %v240 = vor.u32 1.1754944e-38, %v239
        %v241 = vsel %vm238, %v240, %v236
        %v242 = vmul.f32 1.0, %v241
        %v243 = vrcp.pop %v193
        %v244 = vmul.f32 %v193, %v243
        %v245 = vsub.f32 1.0, %v244
        %v246 = vmul.f32 %v243, %v245
        %v247 = vadd.f32 %v243, %v246
        %vm248 = vweird.f32 %v193
        %vm249 = vweird.f32 %v243
        %vm250 = vmor %vm248, %vm249
        %v251 = vsel %vm250, %v243, %v247
        %v252 = vand.u32 2147483647, %v193
        %vm253 = vcmp.eq.f32.partialorder %v252, 8.507059e+37
        %v254 = vand.u32 %v193, 2147483648
        %v255 = vor.u32 1.1754944e-38, %v254
        %v256 = vsel %vm253, %v255, %v251
        %v257 = vmul.f32 1.0, %v256
        %v258 = vrcp.pop %v194
        %v259 = vmul.f32 %v194, %v258
        %v260 = vsub.f32 1.0, %v259
        %v261 = vmul.f32 %v258, %v260
        %v262 = vadd.f32 %v258, %v261
        %vm263 = vweird.f32 %v194
        %vm264 = vweird.f32 %v258
        %vm265 = vmor %vm263, %vm264
        %v266 = vsel %vm265, %v258, %v262
        %v267 = vand.u32 2147483647, %v194
        %vm268 = vcmp.eq.f32.partialorder %v267, 8.507059e+37
        %v269 = vand.u32 %v194, 2147483648
        %v270 = vor.u32 1.1754944e-38, %v269
        %v271 = vsel %vm268, %v270, %v266
        %v272 = vmul.f32 1.0, %v271
        %v273 = vrcp.pop %v195
        %v274 = vmul.f32 %v195, %v273
        %v275 = vsub.f32 1.0, %v274
        %v276 = vmul.f32 %v273, %v275
        %v277 = vadd.f32 %v273, %v276
        %vm278 = vweird.f32 %v195
        %vm279 = vweird.f32 %v273
        %vm280 = vmor %vm278, %vm279
        %v281 = vsel %vm280, %v273, %v277
        %v282 = vand.u32 2147483647, %v195
        %vm283 = vcmp.eq.f32.partialorder %v282, 8.507059e+37
        %v284 = vand.u32 %v195, 2147483648
        %v285 = vor.u32 1.1754944e-38, %v284
        %v286 = vsel %vm283, %v285, %v281
        %v287 = vmul.f32 1.0, %v286
        %v288 = vrcp.pop %v196
        %v289 = vmul.f32 %v196, %v288
        %v290 = vsub.f32 1.0, %v289
        %v291 = vmul.f32 %v288, %v290
        %v292 = vadd.f32 %v288, %v291
        %vm293 = vweird.f32 %v196
        %vm294 = vweird.f32 %v288
        %vm295 = vmor %vm293, %vm294
        %v296 = vsel %vm295, %v288, %v292
        %v297 = vand.u32 2147483647, %v196
        %vm298 = vcmp.eq.f32.partialorder %v297, 8.507059e+37
        %v299 = vand.u32 %v196, 2147483648
        %v300 = vor.u32 1.1754944e-38, %v299
        %v301 = vsel %vm298, %v300, %v296
        %v302 = vmul.f32 1.0, %v301
        %v303 = vrcp.pop %v197
        %v304 = vmul.f32 %v197, %v303
        %v305 = vsub.f32 1.0, %v304
        %v306 = vmul.f32 %v303, %v305
        %v307 = vadd.f32 %v303, %v306
        %vm308 = vweird.f32 %v197
        %vm309 = vweird.f32 %v303
        %vm310 = vmor %vm308, %vm309
        %v311 = vsel %vm310, %v303, %v307
        %v312 = vand.u32 2147483647, %v197
        %vm313 = vcmp.eq.f32.partialorder %v312, 8.507059e+37
        %v314 = vand.u32 %v197, 2147483648
        %v315 = vor.u32 1.1754944e-38, %v314
        %v316 = vsel %vm313, %v315, %v311
        %v317 = vmul.f32 1.0, %v316
        %v318 = vlaneseq
        %v319 = vand.u32 %v318, 127
        %vm320 = vcmp.eq.s32.totalorder %v319, 0
        %321 = vrot.lane.b32.xlu0 %v212, 1
        %v322 = vpop.permute.xlu0 %321
        %323 = vrot.lane.b32.xlu0 %v227, 1
        %v324 = vpop.permute.xlu0 %323
        %325 = vrot.lane.b32.xlu0 %v242, 1
        %v326 = vpop.permute.xlu0 %325
        %327 = vrot.lane.b32.xlu0 %v257, 1
        %v328 = vpop.permute.xlu0 %327
        %329 = vrot.lane.b32.xlu0 %v272, 1
        %v330 = vpop.permute.xlu0 %329
        %331 = vrot.lane.b32.xlu0 %v287, 1
        %v332 = vpop.permute.xlu0 %331
        %333 = vrot.lane.b32.xlu0 %v302, 1
        %v334 = vpop.permute.xlu0 %333
        %335 = vrot.lane.b32.xlu0 %v317, 1
        %v336 = vpop.permute.xlu0 %335
        %v337 = vsel %vm320, -1.0, %v322
        %v338 = vsel %vm320, -1.0, %v324
        %v339 = vsel %vm320, -1.0, %v326
        %v340 = vsel %vm320, -1.0, %v328
        %v341 = vsel %vm320, -1.0, %v330
        %v342 = vsel %vm320, -1.0, %v332
        %v343 = vsel %vm320, -1.0, %v334
        %v344 = vsel %vm320, -1.0, %v336
        %vm345 = vcmp.eq.s32.totalorder %v319, 127
        %346 = vrot.lane.b32.xlu0 %v212, 127
        %v347 = vpop.permute.xlu0 %346
        %348 = vrot.lane.b32.xlu0 %v227, 127
        %v349 = vpop.permute.xlu0 %348
        %350 = vrot.lane.b32.xlu0 %v242, 127
        %v351 = vpop.permute.xlu0 %350
        %352 = vrot.lane.b32.xlu0 %v257, 127
        %v353 = vpop.permute.xlu0 %352
        %354 = vrot.lane.b32.xlu0 %v272, 127
        %v355 = vpop.permute.xlu0 %354
        %356 = vrot.lane.b32.xlu0 %v287, 127
        %v357 = vpop.permute.xlu0 %356
        %358 = vrot.lane.b32.xlu0 %v302, 127
        %v359 = vpop.permute.xlu0 %358
        %360 = vrot.lane.b32.xlu0 %v317, 127
        %v361 = vpop.permute.xlu0 %360
        %v362 = vsel %vm345, -1.0, %v347
        %v363 = vsel %vm345, -1.0, %v349
        %v364 = vsel %vm345, -1.0, %v351
        %v365 = vsel %vm345, -1.0, %v353
        %v366 = vsel %vm345, -1.0, %v355
        %v367 = vsel %vm345, -1.0, %v357
        %v368 = vsel %vm345, -1.0, %v359
        %v369 = vsel %vm345, -1.0, %v361
        %v370 = vmax.f32 %v337, %v212
        %v371 = vmax.f32 %v338, %v227
        %v372 = vmax.f32 %v339, %v242
        %v373 = vmax.f32 %v340, %v257
        %v374 = vmax.f32 %v341, %v272
        %v375 = vmax.f32 %v342, %v287
        %v376 = vmax.f32 %v343, %v302
        %v377 = vmax.f32 %v344, %v317
        %v378 = vmax.f32 %v370, %v362
        %v379 = vmax.f32 %v371, %v363
        %v380 = vmax.f32 %v372, %v364
        %v381 = vmax.f32 %v373, %v365
        %v382 = vmax.f32 %v374, %v366
        %v383 = vmax.f32 %v375, %v367
        %v384 = vmax.f32 %v376, %v368
        %v385 = vmax.f32 %v377, %v369
        %vm394 = vcmask 1040384
        %v395 = vrot.slane %v378, 7
        %v396 = vrot.slane %v379, 7
        %v397 = vsel %vm394, %v395, %v396
        %v398 = vrot.slane %v380, 7
        %v399 = vrot.slane %v381, 7
        %v400 = vsel %vm394, %v398, %v399
        %v401 = vrot.slane %v382, 7
        %v402 = vrot.slane %v383, 7
        %v403 = vsel %vm394, %v401, %v402
        %v404 = vrot.slane %v384, 7
        %v405 = vrot.slane %v385, 7
        %v406 = vsel %vm394, %v404, %v405
        %v415 = vsel %vm394, -1.0, %v395
        %v416 = vsel %vm394, -1.0, %v398
        %v417 = vsel %vm394, -1.0, %v401
        %v418 = vsel %vm394, -1.0, %v404
        %vm419 = vcmask 1046528
        %v420 = vrot.slane %v378, 1
        %v421 = vrot.slane %v379, 1
        %v422 = vsel %vm419, %v420, %v421
        %v423 = vrot.slane %v380, 1
        %v424 = vrot.slane %v381, 1
        %v425 = vsel %vm419, %v423, %v424
        %v426 = vrot.slane %v382, 1
        %v427 = vrot.slane %v383, 1
        %v428 = vsel %vm419, %v426, %v427
        %v429 = vrot.slane %v384, 1
        %v430 = vrot.slane %v385, 1
        %v431 = vsel %vm419, %v429, %v430
        %v440 = vsel %vm419, %v421, -1.0
        %v441 = vsel %vm419, %v424, -1.0
        %v442 = vsel %vm419, %v427, -1.0
        %v443 = vsel %vm419, %v430, -1.0
        %v444 = vmax.f32 %v415, %v378
        %v445 = vmax.f32 %v397, %v379
        %v446 = vmax.f32 %v416, %v380
        %v447 = vmax.f32 %v400, %v381
        %v448 = vmax.f32 %v417, %v382
        %v449 = vmax.f32 %v403, %v383
        %v450 = vmax.f32 %v418, %v384
        %v451 = vmax.f32 %v406, %v385
        %v452 = vmax.f32 %v444, %v422
        %v453 = vmax.f32 %v445, %v440
        %v454 = vmax.f32 %v446, %v425
        %v455 = vmax.f32 %v447, %v441
        %v456 = vmax.f32 %v448, %v428
        %v457 = vmax.f32 %v449, %v442
        %v458 = vmax.f32 %v450, %v431
        %v459 = vmax.f32 %v451, %v443
        %vm460 = vcmp.eq.f32.partialorder %v452, %v212
        %vm461 = vcmp.eq.f32.partialorder %v453, %v227
        %vm462 = vcmp.eq.f32.partialorder %v454, %v242
        %vm463 = vcmp.eq.f32.partialorder %v455, %v257
        %vm464 = vcmp.eq.f32.partialorder %v456, %v272
        %vm465 = vcmp.eq.f32.partialorder %v457, %v287
        %vm466 = vcmp.eq.f32.partialorder %v458, %v302
        %vm467 = vcmp.eq.f32.partialorder %v459, %v317
        %v468 = vsel %vm460, %v212, 0.0
        %v469 = vsel %vm461, %v227, 0.0
        %v470 = vsel %vm462, %v242, 0.0
        %v471 = vsel %vm463, %v257, 0.0
        %v472 = vsel %vm464, %v272, 0.0
        %v473 = vsel %vm465, %v287, 0.0
        %v474 = vsel %vm466, %v302, 0.0
        %v475 = vsel %vm467, %v317, 0.0
        %476 = vst [vmem:[%s155] sm:$0xff] %v468
        %477 = vst [vmem:[%s155 + $0x8] sm:$0xff] %v469
        %478 = vst [vmem:[%s155 + $0x10] sm:$0xff] %v470
        %479 = vst [vmem:[%s155 + $0x18] sm:$0xff] %v471
        %480 = vst [vmem:[%s155 + $0x20] sm:$0xff] %v472
        %481 = vst [vmem:[%s155 + $0x28] sm:$0xff] %v473
        %482 = vst [vmem:[%s155 + $0x30] sm:$0xff] %v474
        %483 = vst [vmem:[%s155 + $0x38] sm:$0xff] %v475
        %s484 = sand.u32 %s68, 1
        %s485 = scalar_lea.sflag [#allocation4], %s484
        %s486 = sand.u32 %s68, 1
        %s487 = smul.addr %s486, 64
        %s488 = scalar_lea.vmem [#allocation5], %s487
        // Predicated region
        $region29: #{tpu_custom_call.1} parent=23 // pred_check
          %p489 = pneg %p78
        $region30: #{tpu_custom_call.1} parent=23 // pred_check_branch
          %491 = sbr.rel (%p489) target = $region32
        $region31: #{tpu_custom_call.1} parent=23 // pred_region
          %s492 = smul.u32 4, %s23
          %494 = vsyncadd %s485, 0
          %s495 = smul.addr %s492, 2
          %s496 = smul.addr %s22, 16
          %s497 = sadd.s32 %s495, %s496
          %s498 = smul.addr %s497, 8
          %s499 = scalar_lea.hbm %s1, %s498
          %s500 = sshll.u32 %s488, 4
          %s501 = int_to_ptr.vmem [resolvable:$true] %s500
          %s502 = sshll.u32 %s499, 4
          %s503 = int_to_ptr.hbm [resolvable:$true] %s502
          %508 = dma.vmem_to_hbm [thread:$0]  %s501, 1024, %s503, %s485, 128, 128, 8
        $region32: #{tpu_custom_call.1} parent=23 // pred_fallthru
          _
      $region24: #{tpu_custom_call.1} parent=5 // pred_fallthru
        _
      %p509 = scmp.le.s32.totalorder 2, %s13
      // Predicated region
      $region33: #{tpu_custom_call.1} parent=5 // pred_check
        %p510 = pneg %p509
      $region34: #{tpu_custom_call.1} parent=5 // pred_check_branch
        %512 = sbr.rel (%p510) target = $region36
      $region35: #{tpu_custom_call.1} parent=5 // pred_region
        %s513 = ssub.s32 %s13, 2
        // Predicated region
        $region37: #{tpu_custom_call.1} parent=35 // pred_check
          %p514 = pneg %p84
        $region38: #{tpu_custom_call.1} parent=35 // pred_check_branch
          %516 = sbr.rel (%p514) target = $region40
        $region39: #{tpu_custom_call.1} parent=35 // pred_region
          %s517 = sand.u32 %s69, 1
          %s518 = scalar_lea.sflag [#allocation4], %s517
          %s519 = sand.u32 %s69, 1
          %s520 = smul.addr %s519, 64
          %s521 = scalar_lea.vmem [#allocation5], %s520
          %523 = dma.done %s518, 1024
        $region40: #{tpu_custom_call.1} parent=35 // pred_fallthru
          _
      $region36: #{tpu_custom_call.1} parent=5 // pred_fallthru
        _
    $region6: #{tpu_custom_call.1} parent=1 // loop_footer
      %s17 = sadd.s32 1, %s13
    $region7: #{tpu_custom_call.1} parent=1 // loop_footer_branch
      %12 = sbr.rel target = $region3
    $region8: #{tpu_custom_call.1} parent=1 // loop_exit
      _
    %524 = vsyncpa [#allocation3], 1
    %s525 = scalar_lea.sflag [#allocation3], 1
    %526 = vsyncpa %s525, 1
    %527 = vsyncpa [#allocation4], 1
    %s528 = scalar_lea.sflag [#allocation4], 1
    %529 = vsyncpa %s528, 1

</llo_original>
